<compile_context>
chip_gen: v7x
topology: tpu7x:2x2x1
jax: 0.10.0
libtpu: 0.0.40
codegen_flags: <defaults>
</compile_context>

<pallas_src>
import functools
import math

import jax
import jax.numpy as jnp
from jax import lax
from jax.experimental import pallas as pl
from jax.experimental.pallas import tpu as pltpu


def _round_up(v: int, m: int) -> int:
    return (v + m - 1) // m * m


def _noisy_linear_kernel(x_ref, mu_w_ref, sg_w_ref, eps_w_ref,
                         mu_b_ref, sg_b_ref, eps_b_ref, o_ref, acc_ref,
                         *, compute_dtype):
    k = pl.program_id(2)

    @pl.when(k == 0)
    def _():
        acc_ref[...] = jnp.zeros_like(acc_ref)

    # Compose the noisy weight tile in f32 on the VPU, cast only for the MXU feed.
    w = mu_w_ref[...] + sg_w_ref[...] * eps_w_ref[...]              # (tn, tk), f32
    xb = x_ref[...].astype(compute_dtype)                            # (tm, tk)
    wb = w.astype(compute_dtype)
    # Contract x dim 1 with w dim 1 (== x @ w.T) -> (tm, tn), no in-kernel transpose.
    acc_ref[...] += lax.dot_general(
        xb, wb, dimension_numbers=(((1,), (1,)), ((), ())),
        preferred_element_type=jnp.float32)

    @pl.when(k == pl.num_programs(2) - 1)
    def _():
        b = mu_b_ref[...] + sg_b_ref[...] * eps_b_ref[...]           # (1, tn), f32
        o_ref[...] = (acc_ref[...] + b).astype(o_ref.dtype)


def _plain_linear_kernel(x_ref, mu_w_ref, mu_b_ref, o_ref, acc_ref, *, compute_dtype):
    k = pl.program_id(2)

    @pl.when(k == 0)
    def _():
        acc_ref[...] = jnp.zeros_like(acc_ref)

    acc_ref[...] += lax.dot_general(
        x_ref[...].astype(compute_dtype), mu_w_ref[...].astype(compute_dtype),
        dimension_numbers=(((1,), (1,)), ((), ())),
        preferred_element_type=jnp.float32)

    @pl.when(k == pl.num_programs(2) - 1)
    def _():
        o_ref[...] = (acc_ref[...] + mu_b_ref[...]).astype(o_ref.dtype)


def noisy_linear_forward(x, mu_W, sigma_W, eps_W, mu_bias, sigma_bias, eps_bias,
                         training: bool = True, compute_dtype=jnp.float32,
                         tm: int = 128, tn: int = 256, tk: int = 512):
    """Pallas implementation of NoisyLinear.forward (tiled, pipelined)."""
    lead_shape = x.shape[:-1]
    in_features = x.shape[-1]
    out_features = mu_W.shape[0]
    x2d = x.reshape(-1, in_features)
    batch = x2d.shape[0]

    # Shrink tiles for small problems, keeping (8, 128) TPU tiling granularity and a
    # lane-dense (multiple-of-128) output last dimension. Defaults (128, 256, 512) give
    # a double-buffered working set of ~4 MiB (training) — far under the 32 MiB scoped
    # VMEM limit that is safe on v5e / v6e / v7x.
    tm = min(tm, _round_up(batch, 8))
    tn = min(tn, _round_up(out_features, 128))
    tk = min(tk, _round_up(in_features, 128))

    M = _round_up(batch, tm)
    N = _round_up(out_features, tn)
    K = _round_up(in_features, tk)

    def pad2(a, rows, cols):
        return jnp.pad(a, ((0, rows - a.shape[0]), (0, cols - a.shape[1])))

    x_p = pad2(x2d, M, K)
    mu_w_p = pad2(mu_W, N, K)
    mu_b_p = pad2(mu_bias.reshape(1, -1), 1, N)

    grid = (M // tm, N // tn, K // tk)
    x_spec = pl.BlockSpec((tm, tk), lambda i, j, k: (i, k))
    w_spec = pl.BlockSpec((tn, tk), lambda i, j, k: (j, k))
    b_spec = pl.BlockSpec((1, tn), lambda i, j, k: (0, j))
    o_spec = pl.BlockSpec((tm, tn), lambda i, j, k: (i, j))

    compiler_params = pltpu.CompilerParams(
        dimension_semantics=("parallel", "parallel", "arbitrary"),
        vmem_limit_bytes=32 * 1024 * 1024)

    n_weight_streams = 3 if training else 1
    cost = pl.CostEstimate(
        flops=2 * M * N * K,
        transcendentals=0,
        bytes_accessed=4 * (M * K + n_weight_streams * (N * K + N) + M * N))

    if training:
        sg_w_p = pad2(sigma_W, N, K)
        eps_w_p = pad2(eps_W, N, K)
        sg_b_p = pad2(sigma_bias.reshape(1, -1), 1, N)
        eps_b_p = pad2(eps_bias.reshape(1, -1), 1, N)
        out = pl.pallas_call(
            functools.partial(_noisy_linear_kernel, compute_dtype=compute_dtype),
            out_shape=jax.ShapeDtypeStruct((M, N), x.dtype),
            grid_spec=pltpu.PrefetchScalarGridSpec(
                num_scalar_prefetch=0, grid=grid,
                in_specs=[x_spec, w_spec, w_spec, w_spec, b_spec, b_spec, b_spec],
                out_specs=o_spec,
                scratch_shapes=[pltpu.VMEM((tm, tn), jnp.float32)]),
            compiler_params=compiler_params,
            cost_estimate=cost,
        )(x_p, mu_w_p, sg_w_p, eps_w_p, mu_b_p, sg_b_p, eps_b_p)
    else:
        # Eval path streams only mu_W / mu_bias from HBM (no zero-eps arrays).
        out = pl.pallas_call(
            functools.partial(_plain_linear_kernel, compute_dtype=compute_dtype),
            out_shape=jax.ShapeDtypeStruct((M, N), x.dtype),
            grid_spec=pltpu.PrefetchScalarGridSpec(
                num_scalar_prefetch=0, grid=grid,
                in_specs=[x_spec, w_spec, b_spec],
                out_specs=o_spec,
                scratch_shapes=[pltpu.VMEM((tm, tn), jnp.float32)]),
            compiler_params=compiler_params,
            cost_estimate=cost,
        )(x_p, mu_w_p, mu_b_p)

    return out[:batch, :out_features].reshape(*lead_shape, out_features)


def init_noisy_linear_params(key, in_features: int, out_features: int,
                             noisy_std: float = 0.5):
    """Deterministic re-implementation of NoisyLinear.reset() + sample()."""
    k_muw, k_mub, k_epsw, k_epsb = jax.random.split(key, 4)
    bound = 1.0 / math.sqrt(in_features)
    mu_W = jax.random.uniform(k_muw, (out_features, in_features),
                              minval=-bound, maxval=bound, dtype=jnp.float32)
    mu_bias = jax.random.uniform(k_mub, (out_features,),
                                 minval=-bound, maxval=bound, dtype=jnp.float32)
    sigma_val = noisy_std / math.sqrt(in_features)
    sigma_W = jnp.full((out_features, in_features), sigma_val, dtype=jnp.float32)
    sigma_bias = jnp.full((out_features,), sigma_val, dtype=jnp.float32)
    eps_W = jax.random.normal(k_epsw, (out_features, in_features), dtype=jnp.float32)
    eps_bias = jax.random.normal(k_epsb, (out_features,), dtype=jnp.float32)
    return mu_W, sigma_W, mu_bias, sigma_bias, eps_W, eps_bias


if __name__ == "__main__":
    key = jax.random.PRNGKey(0)
    k_params, k_x, k_params2, k_x2, k_x3 = jax.random.split(key, 5)

    # --- Small aligned-ish case -------------------------------------------------
    batch, in_features, out_features = 8, 32, 64
    mu_W, sigma_W, mu_bias, sigma_bias, eps_W, eps_bias = init_noisy_linear_params(
        k_params, in_features, out_features, noisy_std=0.5)
    x = jax.random.normal(k_x, (batch, in_features), dtype=jnp.float32)

    # Training mode, f32 compute (exact semantics of the PyTorch module).
    y = noisy_linear_forward(x, mu_W, sigma_W, eps_W, mu_bias, sigma_bias, eps_bias,
                             training=True)
    jax.block_until_ready(y)
    w_ref = mu_W + sigma_W * eps_W
    b_ref = mu_bias + sigma_bias * eps_bias
    y_ref = x @ w_ref.T + b_ref
    assert y.shape == (batch, out_features)
    assert jnp.allclose(y, y_ref, atol=1e-5, rtol=1e-5)

    # Eval mode (weight = mu_W, bias = mu_bias), only mu tensors are streamed.
    y_eval = noisy_linear_forward(x, mu_W, sigma_W, eps_W, mu_bias, sigma_bias,
                                  eps_bias, training=False)
    jax.block_until_ready(y_eval)
    assert jnp.allclose(y_eval, x @ mu_W.T + mu_bias, atol=1e-5, rtol=1e-5)

    # bf16 MXU feed (v6e/v7x fast path), f32 accumulation -> relaxed tolerance.
    y_bf16 = noisy_linear_forward(x, mu_W, sigma_W, eps_W, mu_bias, sigma_bias,
                                  eps_bias, training=True, compute_dtype=jnp.bfloat16)
    jax.block_until_ready(y_bf16)
    assert jnp.allclose(y_bf16, y_ref, atol=5e-2, rtol=5e-2)

    # --- Unaligned shapes: exercise the padding / remainder handling -------------
    b2, in2, out2 = 5, 200, 130
    mu_W2, sigma_W2, mu_bias2, sigma_bias2, eps_W2, eps_bias2 = init_noisy_linear_params(
        k_params2, in2, out2, noisy_std=0.5)
    x2 = jax.random.normal(k_x2, (b2, in2), dtype=jnp.float32)
    y2 = noisy_linear_forward(x2, mu_W2, sigma_W2, eps_W2, mu_bias2, sigma_bias2,
                              eps_bias2, training=True)
    jax.block_until_ready(y2)
    y2_ref = x2 @ (mu_W2 + sigma_W2 * eps_W2).T + (mu_bias2 + sigma_bias2 * eps_bias2)
    assert y2.shape == (b2, out2)
    assert jnp.allclose(y2, y2_ref, atol=1e-4, rtol=1e-4)

    # --- Leading batch dims (F.linear semantics): x is (2, 3, in_features) -------
    x3 = jax.random.normal(k_x3, (2, 3, in_features), dtype=jnp.float32)
    y3 = noisy_linear_forward(x3, mu_W, sigma_W, eps_W, mu_bias, sigma_bias, eps_bias,
                              training=True)
    jax.block_until_ready(y3)
    y3_ref = x3 @ w_ref.T + b_ref
    assert y3.shape == (2, 3, out_features)
    assert jnp.allclose(y3, y3_ref, atol=1e-5, rtol=1e-5)

    print("KERNEL_OK")
</pallas_src>

<mosaic_0001>
module attributes {stable_mosaic.version = 11 : i64} {
  func.func @_noisy_linear_kernel(%arg0: i32, %arg1: i32, %arg2: i32, %arg3: memref<8x128xf32, #tpu.memory_space<vmem>>, %arg4: memref<128x128xf32, #tpu.memory_space<vmem>>, %arg5: memref<128x128xf32, #tpu.memory_space<vmem>>, %arg6: memref<128x128xf32, #tpu.memory_space<vmem>>, %arg7: memref<1x128xf32, #tpu.memory_space<vmem>>, %arg8: memref<1x128xf32, #tpu.memory_space<vmem>>, %arg9: memref<1x128xf32, #tpu.memory_space<vmem>>, %arg10: memref<8x128xf32, #tpu.memory_space<vmem>>, %arg11: memref<8x128xf32, #tpu.memory_space<vmem>>) attributes {dimension_semantics = [#tpu.dimension_semantics<parallel>, #tpu.dimension_semantics<parallel>, #tpu.dimension_semantics<arbitrary>], iteration_bounds = array<i64: 1, 1, 1>, scalar_prefetch = 0 : i64, scratch_operands = 1 : i64, tpu.core_type = #tpu.core_type<tc>, window_params = [{transform_indices = @transform_0, window_bounds = array<i64: 8, 128>}, {transform_indices = @transform_1, window_bounds = array<i64: 128, 128>}, {transform_indices = @transform_2, window_bounds = array<i64: 128, 128>}, {transform_indices = @transform_3, window_bounds = array<i64: 128, 128>}, {transform_indices = @transform_4, window_bounds = array<i64: 1, 128>}, {transform_indices = @transform_5, window_bounds = array<i64: 1, 128>}, {transform_indices = @transform_6, window_bounds = array<i64: 1, 128>}, {transform_indices = @transform_7, window_bounds = array<i64: 8, 128>}]} {
    %c0_i32 = arith.constant 0 : i32
    %0 = arith.cmpi eq, %arg2, %c0_i32 : i32
    %1 = arith.extui %0 : i1 to i32
    %c0_i32_0 = arith.constant 0 : i32
    %2 = arith.cmpi ne, %1, %c0_i32_0 : i32
    scf.if %2 {
      %cst_14 = arith.constant 0.000000e+00 : f32
      %16 = vector.broadcast %cst_14 : f32 to vector<8x128xf32>
      %c0_15 = arith.constant 0 : index
      %c0_16 = arith.constant 0 : index
      %17 = vector.load %arg11[%c0_15, %c0_16] : memref<8x128xf32, #tpu.memory_space<vmem>>, vector<8x128xf32>
      tpu.vector_store %arg11[%c0_15, %c0_16], %16 {strides = array<i32>} : memref<8x128xf32, #tpu.memory_space<vmem>>, vector<8x128xf32>,
    } else {
    }
    %c0 = arith.constant 0 : index
    %c0_1 = arith.constant 0 : index
    %3 = vector.load %arg4[%c0, %c0_1] : memref<128x128xf32, #tpu.memory_space<vmem>>, vector<128x128xf32>
    %c0_2 = arith.constant 0 : index
    %c0_3 = arith.constant 0 : index
    %4 = vector.load %arg5[%c0_2, %c0_3] : memref<128x128xf32, #tpu.memory_space<vmem>>, vector<128x128xf32>
    %c0_4 = arith.constant 0 : index
    %c0_5 = arith.constant 0 : index
    %5 = vector.load %arg6[%c0_4, %c0_5] : memref<128x128xf32, #tpu.memory_space<vmem>>, vector<128x128xf32>
    %6 = arith.mulf %4, %5 : vector<128x128xf32>
    %7 = arith.addf %3, %6 : vector<128x128xf32>
    %c0_6 = arith.constant 0 : index
    %c0_7 = arith.constant 0 : index
    %8 = vector.load %arg3[%c0_6, %c0_7] : memref<8x128xf32, #tpu.memory_space<vmem>>, vector<8x128xf32>
    %c0_8 = arith.constant 0 : index
    %c0_9 = arith.constant 0 : index
    %9 = vector.load %arg11[%c0_8, %c0_9] : memref<8x128xf32, #tpu.memory_space<vmem>>, vector<8x128xf32>
    %cst = arith.constant dense<0.000000e+00> : vector<8x128xf32>
    %10 = tpu.matmul %8, %7, %cst {dimension_numbers = #tpu.dot_dimension_numbers<[1], [1], [0], [0], [0, 0, 1, 0], [], []>} : vector<8x128xf32>, vector<128x128xf32>, vector<8x128xf32> -> vector<8x128xf32>
    %11 = arith.addf %9, %10 : vector<8x128xf32>
    %c0_10 = arith.constant 0 : index
    %c0_11 = arith.constant 0 : index
    %12 = vector.load %arg11[%c0_10, %c0_11] : memref<8x128xf32, #tpu.memory_space<vmem>>, vector<8x128xf32>
    tpu.vector_store %arg11[%c0_10, %c0_11], %11 {strides = array<i32>} : memref<8x128xf32, #tpu.memory_space<vmem>>, vector<8x128xf32>,
    %c0_i32_12 = arith.constant 0 : i32
    %13 = arith.cmpi eq, %arg2, %c0_i32_12 : i32
    %14 = arith.extui %13 : i1 to i32
    %c0_i32_13 = arith.constant 0 : i32
    %15 = arith.cmpi ne, %14, %c0_i32_13 : i32
    scf.if %15 {
      %c0_14 = arith.constant 0 : index
      %c0_15 = arith.constant 0 : index
      %16 = vector.load %arg7[%c0_14, %c0_15] : memref<1x128xf32, #tpu.memory_space<vmem>>, vector<1x128xf32>
      %c0_16 = arith.constant 0 : index
      %c0_17 = arith.constant 0 : index
      %17 = vector.load %arg8[%c0_16, %c0_17] : memref<1x128xf32, #tpu.memory_space<vmem>>, vector<1x128xf32>
      %c0_18 = arith.constant 0 : index
      %c0_19 = arith.constant 0 : index
      %18 = vector.load %arg9[%c0_18, %c0_19] : memref<1x128xf32, #tpu.memory_space<vmem>>, vector<1x128xf32>
      %19 = arith.mulf %17, %18 : vector<1x128xf32>
      %20 = arith.addf %16, %19 : vector<1x128xf32>
      %c0_20 = arith.constant 0 : index
      %c0_21 = arith.constant 0 : index
      %21 = vector.load %arg11[%c0_20, %c0_21] : memref<8x128xf32, #tpu.memory_space<vmem>>, vector<8x128xf32>
      %22 = vector.broadcast %20 : vector<1x128xf32> to vector<8x128xf32>
      %23 = arith.addf %21, %22 : vector<8x128xf32>
      %c0_22 = arith.constant 0 : index
      %c0_23 = arith.constant 0 : index
      %24 = vector.load %arg10[%c0_22, %c0_23] : memref<8x128xf32, #tpu.memory_space<vmem>>, vector<8x128xf32>
      tpu.vector_store %arg10[%c0_22, %c0_23], %23 {strides = array<i32>} : memref<8x128xf32, #tpu.memory_space<vmem>>, vector<8x128xf32>,
    } else {
    }
    return
  }
  func.func @transform_0(%arg0: i32, %arg1: i32, %arg2: i32) -> (i32, i32) {
    %c0_i32 = arith.constant 0 : i32
    return %arg0, %arg2 : i32, i32
  }
  func.func @transform_1(%arg0: i32, %arg1: i32, %arg2: i32) -> (i32, i32) {
    %c0_i32 = arith.constant 0 : i32
    return %arg1, %arg2 : i32, i32
  }
  func.func @transform_2(%arg0: i32, %arg1: i32, %arg2: i32) -> (i32, i32) {
    %c0_i32 = arith.constant 0 : i32
    return %arg1, %arg2 : i32, i32
  }
  func.func @transform_3(%arg0: i32, %arg1: i32, %arg2: i32) -> (i32, i32) {
    %c0_i32 = arith.constant 0 : i32
    return %arg1, %arg2 : i32, i32
  }
  func.func @transform_4(%arg0: i32, %arg1: i32, %arg2: i32) -> (i32, i32) {
    %c0_i32 = arith.constant 0 : i32
    %c0_i32_0 = arith.constant 0 : i32
    return %c0_i32, %arg1 : i32, i32
  }
  func.func @transform_5(%arg0: i32, %arg1: i32, %arg2: i32) -> (i32, i32) {
    %c0_i32 = arith.constant 0 : i32
    %c0_i32_0 = arith.constant 0 : i32
    return %c0_i32, %arg1 : i32, i32
  }
  func.func @transform_6(%arg0: i32, %arg1: i32, %arg2: i32) -> (i32, i32) {
    %c0_i32 = arith.constant 0 : i32
    %c0_i32_0 = arith.constant 0 : i32
    return %c0_i32, %arg1 : i32, i32
  }
  func.func @transform_7(%arg0: i32, %arg1: i32, %arg2: i32) -> (i32, i32) {
    %c0_i32 = arith.constant 0 : i32
    return %arg0, %arg1 : i32, i32
  }
}

</mosaic_0001>

<llo_original>
// kernel: tpu_custom_call.1
$region0: #{tpu_custom_call.1}
  #allocation0 [shape = 'u32[]', space=smem, size = 0x4, offset = 0x4, fixed_abs, tag = 'smem constant byte address 0x4 - core index']
  #allocation1 [shape = 'u32[144,128]{1,0:T(1,128)}', space=vmem, size = 0x12000, scoped, tag = 'internal scratch']
  #allocation2 [shape = 'f32[8,128]{1,0:T(8,128)}', space=vmem, size = 0x1000, scoped, tag = 'scratch operand']
  %s0 = inlined_call_operand.hbm [shape: f32[8,128], index: 0, kind: input, shape index: {}]
  %s1 = inlined_call_operand.hbm [shape: f32[128,128], index: 1, kind: input, shape index: {}]
  %s2 = inlined_call_operand.hbm [shape: f32[128,128], index: 2, kind: input, shape index: {}]
  %s3 = inlined_call_operand.hbm [shape: f32[128,128], index: 3, kind: input, shape index: {}]
  %s4 = inlined_call_operand.vmem [shape: f32[1,128], index: 4, kind: input, shape index: {}]
  %s5 = inlined_call_operand.vmem [shape: f32[1,128], index: 5, kind: input, shape index: {}]
  %s6 = inlined_call_operand.vmem [shape: f32[1,128], index: 6, kind: input, shape index: {}]
  %s7 = inlined_call_operand.hbm [shape: f32[8,128], index: 7, kind: output, shape index: {}]
  %s8 = sld [smem:[#allocation0]]
  $region62: #{tpu_custom_call.1} parent=0
    _
  %s10 = ssub.s32 1, %s8
  %s11 = scalar_select 0, %s10, %s8
  $region1: #{tpu_custom_call.1} parent=0
    #allocation3 [shape = 'u8[4096]{0}', space=vmem, size = 0x1000, scoped, tag = 'input window, operand 0, single buffered']
    #allocation4 [shape = 's32[1]{0}', space=sflag, size = 0x4, scoped, tag = 'scoped memory for tpu_custom_call.1']
    #allocation5 [shape = 's32[1]{0}', space=sflag, size = 0x4, scoped, tag = 'scoped memory for tpu_custom_call.1']
    #allocation6 [shape = 'u8[65536]{0}', space=vmem, size = 0x10000, scoped, tag = 'input window, operand 1, single buffered']
    #allocation7 [shape = 's32[1]{0}', space=sflag, size = 0x4, scoped, tag = 'scoped memory for tpu_custom_call.1']
    #allocation8 [shape = 'u8[65536]{0}', space=vmem, size = 0x10000, scoped, tag = 'input window, operand 2, single buffered']
    #allocation9 [shape = 'u8[65536]{0}', space=vmem, size = 0x10000, scoped, tag = 'input window, operand 3, single buffered']
    #allocation10 [shape = 's32[1]{0}', space=sflag, size = 0x4, scoped, tag = 'scoped memory for tpu_custom_call.1']
    #allocation11 [shape = 'u8[4096]{0}', space=vmem, size = 0x1000, scoped, tag = 'output window, operand 0, single buffered']
    %12 = vsyncpa [#allocation4], 0
    %13 = vsyncpa [#allocation7], 0
    %14 = vsyncpa [#allocation10], 0
    %15 = vsyncpa [#allocation5], 0
    // Predicated region
    $region2: #{tpu_custom_call.1} parent=1 // pred_check
      _
    $region3: #{tpu_custom_call.1} parent=1 // pred_check_branch
      %17 = sbr.rel (0) target = $region5
    $region4: #{tpu_custom_call.1} parent=1 // pred_region
      %s19 = ssub.s32 128, 128
      %20 = vsyncadd [#allocation4], %s19
      %s22 = sshll.u32 [#allocation3], 4
      %s23 = int_to_ptr.vmem [resolvable:$true] %s22
      %25 = dma.hbm_to_vmem [thread:$0]  %s0, 128, %s23, [#allocation4]
    $region5: #{tpu_custom_call.1} parent=1 // pred_fallthru
      _
    // Predicated region
    $region6: #{tpu_custom_call.1} parent=1 // pred_check
      _
    $region7: #{tpu_custom_call.1} parent=1 // pred_check_branch
      %27 = sbr.rel (0) target = $region9
    $region8: #{tpu_custom_call.1} parent=1 // pred_region
      %s29 = ssub.s32 2048, 2048
      %30 = vsyncadd [#allocation7], %s29
      %s31 = sshll.u32 [#allocation6], 4
      %s32 = int_to_ptr.vmem [resolvable:$true] %s31
      %37 = dma.hbm_to_vmem [thread:$0]  %s1, 2048, %s32, [#allocation7], 128, 128, 8
    $region9: #{tpu_custom_call.1} parent=1 // pred_fallthru
      _
    // Predicated region
    $region10: #{tpu_custom_call.1} parent=1 // pred_check
      _
    $region11: #{tpu_custom_call.1} parent=1 // pred_check_branch
      %39 = sbr.rel (0) target = $region13
    $region12: #{tpu_custom_call.1} parent=1 // pred_region
      %s41 = ssub.s32 2048, 2048
      %42 = vsyncadd [#allocation7], %s41
      %s43 = sshll.u32 [#allocation8], 4
      %s44 = int_to_ptr.vmem [resolvable:$true] %s43
      %49 = dma.hbm_to_vmem [thread:$0]  %s2, 2048, %s44, [#allocation7], 128, 128, 8
    $region13: #{tpu_custom_call.1} parent=1 // pred_fallthru
      _
    // Predicated region
    $region14: #{tpu_custom_call.1} parent=1 // pred_check
      _
    $region15: #{tpu_custom_call.1} parent=1 // pred_check_branch
      %51 = sbr.rel (0) target = $region17
    $region16: #{tpu_custom_call.1} parent=1 // pred_region
      %s53 = ssub.s32 2048, 2048
      %54 = vsyncadd [#allocation10], %s53
      %s55 = sshll.u32 [#allocation9], 4
      %s56 = int_to_ptr.vmem [resolvable:$true] %s55
      %61 = dma.hbm_to_vmem [thread:$0]  %s3, 2048, %s56, [#allocation10], 128, 128, 8
    $region17: #{tpu_custom_call.1} parent=1 // pred_fallthru
      _
    // Predicated region
    $region18: #{tpu_custom_call.1} parent=1 // pred_check
      _
    $region19: #{tpu_custom_call.1} parent=1 // pred_check_branch
      %63 = sbr.rel (0) target = $region21
    $region20: #{tpu_custom_call.1} parent=1 // pred_region
      _
    $region21: #{tpu_custom_call.1} parent=1 // pred_fallthru
      _
    // Predicated region
    $region22: #{tpu_custom_call.1} parent=1 // pred_check
      _
    $region23: #{tpu_custom_call.1} parent=1 // pred_check_branch
      %65 = sbr.rel (0) target = $region25
    $region24: #{tpu_custom_call.1} parent=1 // pred_region
      _
    $region25: #{tpu_custom_call.1} parent=1 // pred_fallthru
      _
    // Predicated region
    $region26: #{tpu_custom_call.1} parent=1 // pred_check
      _
    $region27: #{tpu_custom_call.1} parent=1 // pred_check_branch
      %67 = sbr.rel (0) target = $region29
    $region28: #{tpu_custom_call.1} parent=1 // pred_region
      _
    $region29: #{tpu_custom_call.1} parent=1 // pred_fallthru
      _
    // Predicated region
    $region30: #{tpu_custom_call.1} parent=1 // pred_check
      _
    $region31: #{tpu_custom_call.1} parent=1 // pred_check_branch
      %69 = sbr.rel (0) target = $region33
    $region32: #{tpu_custom_call.1} parent=1 // pred_region
      %70 = dma.done [#allocation4], 128
    $region33: #{tpu_custom_call.1} parent=1 // pred_fallthru
      _
    // Predicated region
    $region34: #{tpu_custom_call.1} parent=1 // pred_check
      _
    $region35: #{tpu_custom_call.1} parent=1 // pred_check_branch
      %72 = sbr.rel (0) target = $region37
    $region36: #{tpu_custom_call.1} parent=1 // pred_region
      %73 = dma.done [#allocation7], 2048
    $region37: #{tpu_custom_call.1} parent=1 // pred_fallthru
      _
    // Predicated region
    $region38: #{tpu_custom_call.1} parent=1 // pred_check
      _
    $region39: #{tpu_custom_call.1} parent=1 // pred_check_branch
      %75 = sbr.rel (0) target = $region41
    $region40: #{tpu_custom_call.1} parent=1 // pred_region
      %76 = dma.done [#allocation7], 2048
    $region41: #{tpu_custom_call.1} parent=1 // pred_fallthru
      _
    // Predicated region
    $region42: #{tpu_custom_call.1} parent=1 // pred_check
      _
    $region43: #{tpu_custom_call.1} parent=1 // pred_check_branch
      %78 = sbr.rel (0) target = $region45
    $region44: #{tpu_custom_call.1} parent=1 // pred_region
      %79 = dma.done [#allocation10], 2048
    $region45: #{tpu_custom_call.1} parent=1 // pred_fallthru
      _
    %p80 = scmp.eq.s32.totalorder 0, 0
    // Predicated region
    $region46: #{tpu_custom_call.1} parent=1 // pred_check
      %p81 = pneg %p80
    $region47: #{tpu_custom_call.1} parent=1 // pred_check_branch
      %83 = sbr.rel (%p81) target = $region49
    $region48: #{tpu_custom_call.1} parent=1 // pred_region
      %84 = vst [vmem:[#allocation2] sm:$0xff] 0.0
    $region49: #{tpu_custom_call.1} parent=1 // pred_fallthru
      _
    %v85 = vld [vmem:[#allocation6] sm:$0xff]
    %v86 = vld [vmem:[#allocation6 + $0x8] sm:$0xff]
    %v87 = vld [vmem:[#allocation6 + $0x10] sm:$0xff]
    %v88 = vld [vmem:[#allocation6 + $0x18] sm:$0xff]
    %v89 = vld [vmem:[#allocation6 + $0x20] sm:$0xff]
    %v90 = vld [vmem:[#allocation6 + $0x28] sm:$0xff]
    %v91 = vld [vmem:[#allocation6 + $0x30] sm:$0xff]
    %v92 = vld [vmem:[#allocation6 + $0x38] sm:$0xff]
    %v93 = vld [vmem:[#allocation6 + $0x40] sm:$0xff]
    %v94 = vld [vmem:[#allocation6 + $0x48] sm:$0xff]
    %v95 = vld [vmem:[#allocation6 + $0x50] sm:$0xff]
    %v96 = vld [vmem:[#allocation6 + $0x58] sm:$0xff]
    %v97 = vld [vmem:[#allocation6 + $0x60] sm:$0xff]
    %v98 = vld [vmem:[#allocation6 + $0x68] sm:$0xff]
    %v99 = vld [vmem:[#allocation6 + $0x70] sm:$0xff]
    %v100 = vld [vmem:[#allocation6 + $0x78] sm:$0xff]
    %v101 = vld [vmem:[#allocation8] sm:$0xff]
    %v102 = vld [vmem:[#allocation8 + $0x8] sm:$0xff]
    %v103 = vld [vmem:[#allocation8 + $0x10] sm:$0xff]
    %v104 = vld [vmem:[#allocation8 + $0x18] sm:$0xff]
    %v105 = vld [vmem:[#allocation8 + $0x20] sm:$0xff]
    %v106 = vld [vmem:[#allocation8 + $0x28] sm:$0xff]
    %v107 = vld [vmem:[#allocation8 + $0x30] sm:$0xff]
    %v108 = vld [vmem:[#allocation8 + $0x38] sm:$0xff]
    %v109 = vld [vmem:[#allocation8 + $0x40] sm:$0xff]
    %v110 = vld [vmem:[#allocation8 + $0x48] sm:$0xff]
    %v111 = vld [vmem:[#allocation8 + $0x50] sm:$0xff]
    %v112 = vld [vmem:[#allocation8 + $0x58] sm:$0xff]
    %v113 = vld [vmem:[#allocation8 + $0x60] sm:$0xff]
    %v114 = vld [vmem:[#allocation8 + $0x68] sm:$0xff]
    %v115 = vld [vmem:[#allocation8 + $0x70] sm:$0xff]
    %v116 = vld [vmem:[#allocation8 + $0x78] sm:$0xff]
    %v117 = vld [vmem:[#allocation9] sm:$0xff]
    %v118 = vld [vmem:[#allocation9 + $0x8] sm:$0xff]
    %v119 = vld [vmem:[#allocation9 + $0x10] sm:$0xff]
    %v120 = vld [vmem:[#allocation9 + $0x18] sm:$0xff]
    %v121 = vld [vmem:[#allocation9 + $0x20] sm:$0xff]
    %v122 = vld [vmem:[#allocation9 + $0x28] sm:$0xff]
    %v123 = vld [vmem:[#allocation9 + $0x30] sm:$0xff]
    %v124 = vld [vmem:[#allocation9 + $0x38] sm:$0xff]
    %v125 = vld [vmem:[#allocation9 + $0x40] sm:$0xff]
    %v126 = vld [vmem:[#allocation9 + $0x48] sm:$0xff]
    %v127 = vld [vmem:[#allocation9 + $0x50] sm:$0xff]
    %v128 = vld [vmem:[#allocation9 + $0x58] sm:$0xff]
    %v129 = vld [vmem:[#allocation9 + $0x60] sm:$0xff]
    %v130 = vld [vmem:[#allocation9 + $0x68] sm:$0xff]
    %v131 = vld [vmem:[#allocation9 + $0x70] sm:$0xff]
    %v132 = vld [vmem:[#allocation9 + $0x78] sm:$0xff]
    %v133 = vmul.f32 %v101, %v117
    %v134 = vmul.f32 %v102, %v118
    %v135 = vmul.f32 %v103, %v119
    %v136 = vmul.f32 %v104, %v120
    %v137 = vmul.f32 %v105, %v121
    %v138 = vmul.f32 %v106, %v122
    %v139 = vmul.f32 %v107, %v123
    %v140 = vmul.f32 %v108, %v124
    %v141 = vmul.f32 %v109, %v125
    %v142 = vmul.f32 %v110, %v126
    %v143 = vmul.f32 %v111, %v127
    %v144 = vmul.f32 %v112, %v128
    %v145 = vmul.f32 %v113, %v129
    %v146 = vmul.f32 %v114, %v130
    %v147 = vmul.f32 %v115, %v131
    %v148 = vmul.f32 %v116, %v132
    %v149 = vadd.f32 %v85, %v133
    %v150 = vadd.f32 %v86, %v134
    %v151 = vadd.f32 %v87, %v135
    %v152 = vadd.f32 %v88, %v136
    %v153 = vadd.f32 %v89, %v137
    %v154 = vadd.f32 %v90, %v138
    %v155 = vadd.f32 %v91, %v139
    %v156 = vadd.f32 %v92, %v140
    %v157 = vadd.f32 %v93, %v141
    %v158 = vadd.f32 %v94, %v142
    %v159 = vadd.f32 %v95, %v143
    %v160 = vadd.f32 %v96, %v144
    %v161 = vadd.f32 %v97, %v145
    %v162 = vadd.f32 %v98, %v146
    %v163 = vadd.f32 %v99, %v147
    %v164 = vadd.f32 %v100, %v148
    %v165 = vld [vmem:[#allocation3] sm:$0xff]
    %v166 = vld [vmem:[#allocation2] sm:$0xff]
    %167 = vmatprep.subr.mxu0 0.0
    %168 = vmatpush1.xpose.msra.mxu0 %v149
    %169 = vmatprep.subr.mxu0 0.0
    %170 = vmatpush1.xpose.msra.mxu0 %v150
    %171 = vmatprep.subr.mxu0 0.0
    %172 = vmatpush1.xpose.msra.mxu0 %v151
    %173 = vmatprep.subr.mxu0 0.0
    %174 = vmatpush1.xpose.msra.mxu0 %v152
    %175 = vmatprep.subr.mxu0 0.0
    %176 = vmatpush1.xpose.msra.mxu0 %v153
    %177 = vmatprep.subr.mxu0 0.0
    %178 = vmatpush1.xpose.msra.mxu0 %v154
    %179 = vmatprep.subr.mxu0 0.0
    %180 = vmatpush1.xpose.msra.mxu0 %v155
    %181 = vmatprep.subr.mxu0 0.0
    %182 = vmatpush1.xpose.msra.mxu0 %v156
    %183 = vmatprep.subr.mxu0 0.0
    %184 = vmatpush1.xpose.msra.mxu0 %v157
    %185 = vmatprep.subr.mxu0 0.0
    %186 = vmatpush1.xpose.msra.mxu0 %v158
    %187 = vmatprep.subr.mxu0 0.0
    %188 = vmatpush1.xpose.msra.mxu0 %v159
    %189 = vmatprep.subr.mxu0 0.0
    %190 = vmatpush1.xpose.msra.mxu0 %v160
    %191 = vmatprep.subr.mxu0 0.0
    %192 = vmatpush1.xpose.msra.mxu0 %v161
    %193 = vmatprep.subr.mxu0 0.0
    %194 = vmatpush1.xpose.msra.mxu0 %v162
    %195 = vmatprep.subr.mxu0 0.0
    %196 = vmatpush1.xpose.msra.mxu0 %v163
    %197 = vmatprep.subr.mxu0 0.0
    %198 = vmatpush1.xpose.msra.mxu0 %v164
    %199 = vmatprep.subr.mxu0 0.0
    %200 = vmatpush1.xpose.msra.mxu0 0.0
    %201 = vmatprep.subr.mxu0 0.0
    %202 = vmatpush1.xpose.msra.mxu0 0.0
    %203 = vmatprep.subr.mxu0 0.0
    %204 = vmatpush1.xpose.msra.mxu0 0.0
    %205 = vmatprep.subr.mxu0 0.0
    %206 = vmatpush1.xpose.msra.mxu0 0.0
    %207 = vmatprep.subr.mxu0 0.0
    %208 = vmatpush1.xpose.msra.mxu0 0.0
    %209 = vmatprep.subr.mxu0 0.0
    %210 = vmatpush1.xpose.msra.mxu0 0.0
    %211 = vmatprep.subr.mxu0 0.0
    %212 = vmatpush1.xpose.msra.mxu0 0.0
    %213 = vmatprep.subr.mxu0 0.0
    %214 = vmatpush1.xpose.msra.mxu0 0.0
    %215 = vmatprep.subr.mxu0 0.0
    %216 = vmatpush1.xpose.msra.mxu0 0.0
    %217 = vmatprep.subr.mxu0 0.0
    %218 = vmatpush1.xpose.msra.mxu0 0.0
    %219 = vmatprep.subr.mxu0 0.0
    %220 = vmatpush1.xpose.msra.mxu0 0.0
    %221 = vmatprep.subr.mxu0 0.0
    %222 = vmatpush1.xpose.msra.mxu0 0.0
    %223 = vmatprep.subr.mxu0 0.0
    %224 = vmatpush1.xpose.msra.mxu0 0.0
    %225 = vmatprep.subr.mxu0 0.0
    %226 = vmatpush1.xpose.msra.mxu0 0.0
    %227 = vmatprep.subr.mxu0 0.0
    %228 = vmatpush1.xpose.msra.mxu0 0.0
    %229 = vmatprep.subr.mxu0 0.0
    %230 = vmatpush1.xpose.msra.mxu0 0.0
    %231 = vmatprep.mubr.f32.mxu0 0.0
    %232 = vmatmul.mubr.f32.gmra.mrb[0].mxu0 %v165
    %v233 = vpop.f32.mrb[0].mxu0
    %v234 = vadd.f32 0.0, %v233
    %v235 = vpop.f32.mrb[0].mxu0
    %236 = vdwg.mxu0
    %v237 = vadd.f32 %v166, %v234
    %238 = vst [vmem:[#allocation2] sm:$0xff] %v237
    // Predicated region
    $region50: #{tpu_custom_call.1} parent=1 // pred_check
      %p239 = pneg %p80
    $region51: #{tpu_custom_call.1} parent=1 // pred_check_branch
      %241 = sbr.rel (%p239) target = $region53
    $region52: #{tpu_custom_call.1} parent=1 // pred_region
      %v242 = vld [vmem:[%s4] sm:$0x1]
      %v243 = vld [vmem:[%s5] sm:$0x1]
      %v244 = vld [vmem:[%s6] sm:$0x1]
      %v245 = vmul.f32 %v243, %v244
      %v246 = vadd.f32 %v242, %v245
      %v247 = vld [vmem:[#allocation2] sm:$0xff]
      %v249 = vlaneseq
      %v250 = vshrl.u32 %v249, 7
      %v251 = vsub.s32 0, %v250
      %v252 = vrot.slane %v246, %v251
      %v254 = vadd.f32 %v247, %v252
      %255 = vst [vmem:[#allocation11] sm:$0xff] %v254
    $region53: #{tpu_custom_call.1} parent=1 // pred_fallthru
      _
    // Predicated region
    $region54: #{tpu_custom_call.1} parent=1 // pred_check
      _
    $region55: #{tpu_custom_call.1} parent=1 // pred_check_branch
      %257 = sbr.rel (0) target = $region57
    $region56: #{tpu_custom_call.1} parent=1 // pred_region
      %s259 = ssub.s32 128, 128
      %260 = vsyncadd [#allocation5], %s259
      %s262 = sshll.u32 [#allocation11], 4
      %s263 = int_to_ptr.vmem [resolvable:$true] %s262
      %265 = dma.vmem_to_hbm [thread:$0]  %s263, 128, %s7, [#allocation5]
    $region57: #{tpu_custom_call.1} parent=1 // pred_fallthru
      _
    // Predicated region
    $region58: #{tpu_custom_call.1} parent=1 // pred_check
      _
    $region59: #{tpu_custom_call.1} parent=1 // pred_check_branch
      %267 = sbr.rel (0) target = $region61
    $region60: #{tpu_custom_call.1} parent=1 // pred_region
      %268 = dma.done [#allocation5], 128
    $region61: #{tpu_custom_call.1} parent=1 // pred_fallthru
      _
    %269 = vsyncpa [#allocation4], 1
    %270 = vsyncpa [#allocation7], 1
    %271 = vsyncpa [#allocation10], 1
    %272 = vsyncpa [#allocation5], 1

</llo_original>
